<compile_context>
chip_gen: v7x
topology: tpu7x:2x2x1
jax: 0.10.0
libtpu: 0.0.40
codegen_flags: <defaults>
</compile_context>

<pallas_src>
import jax
import jax.numpy as jnp
from jax.experimental import pallas as pl
from jax.experimental.pallas import tpu as pltpu


def _stem_conv_bn_kernel(x_ref, w_ref, shift_ref, o_ref):
    """One (width-tile, batch-tile) step: single MXU matmul + fused BN shift.

    x_ref:     (B, H, K3)       im2col'd rows (bf16); K3 = 3*(W+2)*Cin lanes
    w_ref:     (K3, WC_TILE)    BN-scale-folded banded conv weights (bf16)
    shift_ref: (1, WC_TILE)     BN shift (beta - mean*gamma/sqrt(var+eps)), f32
    o_ref:     (B, H, WC_TILE)  lane-dense output block
    """
    b, h, k3 = x_ref.shape
    lhs = x_ref[...].reshape(b * h, k3)                   # M = B*H rows
    acc = jnp.dot(lhs, w_ref[...], preferred_element_type=jnp.float32)
    y = acc + shift_ref[...]                              # BN shift (scale is in w)
    o_ref[...] = y.reshape(b, h, -1).astype(o_ref.dtype)


def _pick_wc_tile(wcout, k3, bh, budget_bytes):
    """Largest W*Cout tile (full width, or a multiple-of-128 divisor) within budget."""
    def resident(t):
        return (2 * bh * k3 * 2        # x block, bf16, double-buffered
                + 2 * k3 * t * 2       # weight block, bf16, double-buffered
                + 2 * t * 4            # shift block, f32, double-buffered
                + 2 * bh * t * 4       # output block, f32, double-buffered
                + bh * t * 4)          # f32 accumulator
    if wcout < 128 or resident(wcout) <= budget_bytes:
        return wcout
    best = wcout
    t = 128
    while t < wcout:
        if wcout % t == 0 and resident(t) <= budget_bytes:
            best = t
        t += 128
    return best


def stem_forward(xs, conv_w, bn_gamma, bn_beta, bn_mean, bn_var, *, eps=1e-5):
    """Mirrors `Stem.forward(self, x): return self.seq(x[0])` (NCHW in/out)."""
    x = xs[0]                                    # torch-style: take x[0]
    n, cin, h, w = x.shape
    cout = conv_w.shape[0]
    wp = w + 2
    k = wp * cin
    k3 = 3 * k                                   # merged contraction dim
    wcout = w * cout                             # lane-dense output width

    # ---- one-time layout glue (XLA): im2col over the 3x3 kernel rows --------
    x_nhwc = jnp.transpose(x, (0, 2, 3, 1))
    x_pad = jnp.pad(x_nhwc, ((0, 0), (1, 1), (1, 1), (0, 0)))
    x_rows = x_pad.reshape(n, h + 2, k)
    x_im2col = jnp.concatenate([x_rows[:, dh:dh + h, :] for dh in range(3)],
                               axis=-1).astype(jnp.bfloat16)          # (N, H, 3K)

    # ---- banded weights: fold the 3x3 taps AND the BN scale into one slab ---
    # TODO(synk): training-mode BN (batch statistics + running-stat updates) is
    # not expressed in the kernel; inference-mode running stats are folded.
    inv_std = 1.0 / jnp.sqrt(bn_var.astype(jnp.float32) + eps)
    scale_c = bn_gamma.astype(jnp.float32) * inv_std
    shift_c = bn_beta.astype(jnp.float32) - bn_mean.astype(jnp.float32) * scale_c

    wt = jnp.transpose(conv_w, (2, 3, 1, 0)).astype(jnp.float32)      # (3,3,Cin,Cout)
    band = (jnp.arange(wp)[None, :, None] ==
            (jnp.arange(w)[None, None, :] + jnp.arange(3)[:, None, None])
            ).astype(jnp.float32)                                     # (3, W+2, W)
    w_band = jnp.einsum("hdio,dpw->hpiwo", wt, band)                  # (3,W+2,Cin,W,Cout)
    w_band = w_band * scale_c[None, None, None, None, :]              # fold BN scale
    w_flat = w_band.reshape(k3, wcout).astype(jnp.bfloat16)           # (3K, W*Cout)

    shift = jnp.tile(shift_c[None, :], (w, 1)).reshape(1, wcout)      # f32

    # ---- tile sizing ---------------------------------------------------------
    b_imgs = max(1, min(n, 256 // max(h, 1)))    # batch images so B*H ~ 256 rows
    n_tiles = -(-n // b_imgs)
    n_padded = n_tiles * b_imgs
    if n_padded != n:
        x_im2col = jnp.pad(x_im2col, ((0, n_padded - n), (0, 0), (0, 0)))

    wc_tile = _pick_wc_tile(wcout, k3, b_imgs * h, budget_bytes=24 * 1024 * 1024)
    wc_tiles = wcout // wc_tile

    resident = (2 * b_imgs * h * k3 * 2 + 2 * k3 * wc_tile * 2 + 2 * wc_tile * 4
                + 2 * b_imgs * h * wc_tile * 4 + b_imgs * h * wc_tile * 4)
    vmem_limit = int(max(32 * 1024 * 1024, min(2 * resident, 100 * 1024 * 1024)))

    out_flat = pl.pallas_call(
        _stem_conv_bn_kernel,
        out_shape=jax.ShapeDtypeStruct((n_padded, h, wcout), x.dtype),
        grid=(wc_tiles, n_tiles),        # weight tile outer: big slab fetched least
        in_specs=[
            pl.BlockSpec((b_imgs, h, k3), lambda j, i: (i, 0, 0)),
            pl.BlockSpec((k3, wc_tile), lambda j, i: (0, j)),
            pl.BlockSpec((1, wc_tile), lambda j, i: (0, j)),
        ],
        out_specs=pl.BlockSpec((b_imgs, h, wc_tile), lambda j, i: (i, 0, j)),
        compiler_params=pltpu.CompilerParams(
            dimension_semantics=("parallel", "parallel"),
            vmem_limit_bytes=vmem_limit,
        ),
    )(x_im2col, w_flat, shift)

    # (N, H, W*Cout) -> (N, Cout, H, W)  (back to torch NCHW)
    out = out_flat.reshape(n_padded, h, w, cout)[:n]
    return jnp.transpose(out, (0, 3, 1, 2))


if __name__ == "__main__":
    key = jax.random.PRNGKey(0)
    k_x, k_w, k_g, k_b, k_m, k_v = jax.random.split(key, 6)

    N, CIN, H, W = 2, 3, 16, 16
    C_CURR = 64

    img = jax.random.normal(k_x, (N, CIN, H, W), dtype=jnp.float32)
    conv_w = 0.1 * jax.random.normal(k_w, (C_CURR, CIN, 3, 3), dtype=jnp.float32)
    bn_gamma = 1.0 + 0.1 * jax.random.normal(k_g, (C_CURR,), dtype=jnp.float32)
    bn_beta = 0.1 * jax.random.normal(k_b, (C_CURR,), dtype=jnp.float32)
    bn_mean = 0.1 * jax.random.normal(k_m, (C_CURR,), dtype=jnp.float32)
    bn_var = 1.0 + 0.1 * jax.random.uniform(k_v, (C_CURR,), dtype=jnp.float32)

    out = stem_forward((img,), conv_w, bn_gamma, bn_beta, bn_mean, bn_var)
    jax.block_until_ready(out)

    assert out.shape == (N, C_CURR, H, W)
    assert out.dtype == img.dtype

    # Pure-JAX reference: Conv2d(3, C, 3, padding=1, bias=False) + BN (eval mode).
    ref = jax.lax.conv_general_dilated(
        img, conv_w, window_strides=(1, 1), padding=((1, 1), (1, 1)),
        dimension_numbers=("NCHW", "OIHW", "NCHW"),
        precision=jax.lax.Precision.HIGHEST)
    inv_std = 1.0 / jnp.sqrt(bn_var + 1e-5)
    ref = (ref * (bn_gamma * inv_std)[None, :, None, None]
           + (bn_beta - bn_mean * bn_gamma * inv_std)[None, :, None, None])

    # Tolerance covers the intentional bf16 matmul operands (f32 accumulation).
    err = float(jnp.max(jnp.abs(out - ref)))
    assert err < 5e-2, f"max abs err {err}"

    print("KERNEL_OK")
</pallas_src>

<mosaic_0001>
module attributes {stable_mosaic.version = 11 : i64} {
  func.func @_stem_conv_bn_kernel(%arg0: i32, %arg1: i32, %arg2: memref<2x16x162xbf16, #tpu.memory_space<vmem>>, %arg3: memref<162x1024xbf16, #tpu.memory_space<vmem>>, %arg4: memref<1x1024xf32, #tpu.memory_space<vmem>>, %arg5: memref<2x16x1024xf32, #tpu.memory_space<vmem>>) attributes {dimension_semantics = [#tpu.dimension_semantics<parallel>, #tpu.dimension_semantics<parallel>], iteration_bounds = array<i64: 1, 1>, scalar_prefetch = 0 : i64, scratch_operands = 0 : i64, tpu.core_type = #tpu.core_type<tc>, window_params = [{transform_indices = @transform_0, window_bounds = array<i64: 2, 16, 162>}, {transform_indices = @transform_1, window_bounds = array<i64: 162, 1024>}, {transform_indices = @transform_2, window_bounds = array<i64: 1, 1024>}, {transform_indices = @transform_3, window_bounds = array<i64: 2, 16, 1024>}]} {
    %c0 = arith.constant 0 : index
    %c0_0 = arith.constant 0 : index
    %c0_1 = arith.constant 0 : index
    %0 = vector.load %arg2[%c0, %c0_0, %c0_1] : memref<2x16x162xbf16, #tpu.memory_space<vmem>>, vector<2x16x162xbf16>
    %1 = vector.shape_cast %0 : vector<2x16x162xbf16> to vector<32x162xbf16>
    %c0_2 = arith.constant 0 : index
    %c0_3 = arith.constant 0 : index
    %2 = vector.load %arg3[%c0_2, %c0_3] : memref<162x1024xbf16, #tpu.memory_space<vmem>>, vector<162x1024xbf16>
    %cst = arith.constant dense<0.000000e+00> : vector<32x1024xf32>
    %3 = tpu.matmul %1, %2, %cst {dimension_numbers = #tpu.dot_dimension_numbers<[1], [0], [0], [1], [0, 0, 1, 1], [], []>} : vector<32x162xbf16>, vector<162x1024xbf16>, vector<32x1024xf32> -> vector<32x1024xf32>
    %c0_4 = arith.constant 0 : index
    %c0_5 = arith.constant 0 : index
    %4 = vector.load %arg4[%c0_4, %c0_5] : memref<1x1024xf32, #tpu.memory_space<vmem>>, vector<1x1024xf32>
    %5 = vector.broadcast %4 : vector<1x1024xf32> to vector<32x1024xf32>
    %6 = arith.addf %3, %5 : vector<32x1024xf32>
    %7 = vector.shape_cast %6 : vector<32x1024xf32> to vector<2x16x1024xf32>
    %c0_6 = arith.constant 0 : index
    %c0_7 = arith.constant 0 : index
    %c0_8 = arith.constant 0 : index
    %8 = vector.load %arg5[%c0_6, %c0_7, %c0_8] : memref<2x16x1024xf32, #tpu.memory_space<vmem>>, vector<2x16x1024xf32>
    tpu.vector_store %arg5[%c0_6, %c0_7, %c0_8], %7 {strides = array<i32>} : memref<2x16x1024xf32, #tpu.memory_space<vmem>>, vector<2x16x1024xf32>,
    return
  }
  func.func @transform_0(%arg0: i32, %arg1: i32) -> (i32, i32, i32) {
    %c0_i32 = arith.constant 0 : i32
    %c0_i32_0 = arith.constant 0 : i32
    %c0_i32_1 = arith.constant 0 : i32
    return %arg1, %c0_i32, %c0_i32_0 : i32, i32, i32
  }
  func.func @transform_1(%arg0: i32, %arg1: i32) -> (i32, i32) {
    %c0_i32 = arith.constant 0 : i32
    %c0_i32_0 = arith.constant 0 : i32
    return %c0_i32, %arg0 : i32, i32
  }
  func.func @transform_2(%arg0: i32, %arg1: i32) -> (i32, i32) {
    %c0_i32 = arith.constant 0 : i32
    %c0_i32_0 = arith.constant 0 : i32
    return %c0_i32, %arg0 : i32, i32
  }
  func.func @transform_3(%arg0: i32, %arg1: i32) -> (i32, i32, i32) {
    %c0_i32 = arith.constant 0 : i32
    %c0_i32_0 = arith.constant 0 : i32
    return %arg1, %c0_i32, %arg0 : i32, i32, i32
  }
}

</mosaic_0001>

<llo_original>
// kernel: tpu_custom_call.1
$region0: #{tpu_custom_call.1}
  #allocation0 [shape = 'u32[]', space=smem, size = 0x4, offset = 0x4, fixed_abs, tag = 'smem constant byte address 0x4 - core index']
  #allocation1 [shape = 'u32[144,128]{1,0:T(1,128)}', space=vmem, size = 0x12000, scoped, tag = 'internal scratch']
  %s0 = inlined_call_operand.hbm [shape: bf16[2,16,162], index: 0, kind: input, shape index: {}]
  %s1 = inlined_call_operand.hbm [shape: bf16[162,1024], index: 1, kind: input, shape index: {}]
  %s2 = inlined_call_operand.hbm [shape: f32[1,1024], index: 2, kind: input, shape index: {}]
  %s3 = inlined_call_operand.hbm [shape: f32[2,16,1024], index: 3, kind: output, shape index: {}]
  %s4 = sld [smem:[#allocation0]]
  $region34: #{tpu_custom_call.1} parent=0
    _
  %s6 = ssub.s32 1, %s4
  %s7 = scalar_select 0, %s6, %s4
  $region1: #{tpu_custom_call.1} parent=0
    #allocation2 [shape = 'u8[16384]{0}', space=vmem, size = 0x4000, scoped, tag = 'input window, operand 0, single buffered']
    #allocation3 [shape = 's32[1]{0}', space=sflag, size = 0x4, scoped, tag = 'scoped memory for tpu_custom_call.1']
    #allocation4 [shape = 's32[1]{0}', space=sflag, size = 0x4, scoped, tag = 'scoped memory for tpu_custom_call.1']
    #allocation5 [shape = 'u8[344064]{0}', space=vmem, size = 0x54000, scoped, tag = 'input window, operand 1, single buffered']
    #allocation6 [shape = 's32[1]{0}', space=sflag, size = 0x4, scoped, tag = 'scoped memory for tpu_custom_call.1']
    #allocation7 [shape = 'u8[4096]{0}', space=vmem, size = 0x1000, scoped, tag = 'input window, operand 2, single buffered']
    #allocation8 [shape = 'u8[131072]{0}', space=vmem, size = 0x20000, scoped, tag = 'output window, operand 0, single buffered']
    %8 = vsyncpa [#allocation3], 0
    %9 = vsyncpa [#allocation6], 0
    %10 = vsyncpa [#allocation4], 0
    // Predicated region
    $region2: #{tpu_custom_call.1} parent=1 // pred_check
      _
    $region3: #{tpu_custom_call.1} parent=1 // pred_check_branch
      %12 = sbr.rel (0) target = $region5
    $region4: #{tpu_custom_call.1} parent=1 // pred_region
      %s14 = ssub.s32 512, 512
      %15 = vsyncadd [#allocation3], %s14
      %s16 = sshll.u32 [#allocation2], 4
      %s17 = int_to_ptr.vmem [resolvable:$true] %s16
      %22 = dma.hbm_to_vmem [thread:$0]  %s0, 512, %s17, [#allocation3], 128, 128, 8
    $region5: #{tpu_custom_call.1} parent=1 // pred_fallthru
      _
    // Predicated region
    $region6: #{tpu_custom_call.1} parent=1 // pred_check
      _
    $region7: #{tpu_custom_call.1} parent=1 // pred_check_branch
      %24 = sbr.rel (0) target = $region9
    $region8: #{tpu_custom_call.1} parent=1 // pred_region
      %s26 = ssub.s32 10752, 10752
      %27 = vsyncadd [#allocation6], %s26
      %s28 = sshll.u32 [#allocation5], 4
      %s29 = int_to_ptr.vmem [resolvable:$true] %s28
      %34 = dma.hbm_to_vmem [thread:$0]  %s1, 10752, %s29, [#allocation6], 512, 512, 32
    $region9: #{tpu_custom_call.1} parent=1 // pred_fallthru
      _
    // Predicated region
    $region10: #{tpu_custom_call.1} parent=1 // pred_check
      _
    $region11: #{tpu_custom_call.1} parent=1 // pred_check_branch
      %36 = sbr.rel (0) target = $region13
    $region12: #{tpu_custom_call.1} parent=1 // pred_region
      %s38 = ssub.s32 128, 128
      %39 = vsyncadd [#allocation6], %s38
      %s41 = sshll.u32 [#allocation7], 4
      %s42 = int_to_ptr.vmem [resolvable:$true] %s41
      %44 = dma.hbm_to_vmem [thread:$0]  %s2, 128, %s42, [#allocation6]
    $region13: #{tpu_custom_call.1} parent=1 // pred_fallthru
      _
    // Predicated region
    $region14: #{tpu_custom_call.1} parent=1 // pred_check
      _
    $region15: #{tpu_custom_call.1} parent=1 // pred_check_branch
      %46 = sbr.rel (0) target = $region17
    $region16: #{tpu_custom_call.1} parent=1 // pred_region
      %47 = dma.done [#allocation3], 512
    $region17: #{tpu_custom_call.1} parent=1 // pred_fallthru
      _
    // Predicated region
    $region18: #{tpu_custom_call.1} parent=1 // pred_check
      _
    $region19: #{tpu_custom_call.1} parent=1 // pred_check_branch
      %49 = sbr.rel (0) target = $region21
    $region20: #{tpu_custom_call.1} parent=1 // pred_region
      %50 = dma.done [#allocation6], 10752
    $region21: #{tpu_custom_call.1} parent=1 // pred_fallthru
      _
    // Predicated region
    $region22: #{tpu_custom_call.1} parent=1 // pred_check
      _
    $region23: #{tpu_custom_call.1} parent=1 // pred_check_branch
      %52 = sbr.rel (0) target = $region25
    $region24: #{tpu_custom_call.1} parent=1 // pred_region
      %53 = dma.done [#allocation6], 128
    $region25: #{tpu_custom_call.1} parent=1 // pred_fallthru
      _
    %v55 = vld [vmem:[#allocation2] sm:$0xff]
    %v56 = vld [vmem:[#allocation2 + $0x8] sm:$0xff]
    %v57 = vld [vmem:[#allocation2 + $0x10] sm:$0xff]
    %v58 = vld [vmem:[#allocation2 + $0x18] sm:$0xff]
    %v59 = vld [vmem:[#allocation5] sm:$0xff]
    %v60 = vld [vmem:[#allocation5 + $0x8] sm:$0xff]
    %v61 = vld [vmem:[#allocation5 + $0x10] sm:$0xff]
    %v62 = vld [vmem:[#allocation5 + $0x18] sm:$0xff]
    %v63 = vld [vmem:[#allocation5 + $0x20] sm:$0xff]
    %v64 = vld [vmem:[#allocation5 + $0x28] sm:$0xff]
    %v65 = vld [vmem:[#allocation5 + $0x30] sm:$0xff]
    %v66 = vld [vmem:[#allocation5 + $0x38] sm:$0xff]
    %v67 = vld [vmem:[#allocation5 + $0x40] sm:$0xff]
    %v68 = vld [vmem:[#allocation5 + $0x48] sm:$0xff]
    %v69 = vld [vmem:[#allocation5 + $0x50] sm:$0xff]
    %v70 = vld [vmem:[#allocation5 + $0x58] sm:$0xff]
    %v71 = vld [vmem:[#allocation5 + $0x60] sm:$0xff]
    %v72 = vld [vmem:[#allocation5 + $0x68] sm:$0xff]
    %v73 = vld [vmem:[#allocation5 + $0x70] sm:$0xff]
    %v74 = vld [vmem:[#allocation5 + $0x78] sm:$0xff]
    %v75 = vld [vmem:[#allocation5 + $0x80] sm:$0xff]
    %v76 = vld [vmem:[#allocation5 + $0x88] sm:$0xff]
    %v77 = vld [vmem:[#allocation5 + $0x90] sm:$0xff]
    %v78 = vld [vmem:[#allocation5 + $0x98] sm:$0xff]
    %v79 = vld [vmem:[#allocation5 + $0xa0] sm:$0xff]
    %v80 = vld [vmem:[#allocation5 + $0xa8] sm:$0xff]
    %v81 = vld [vmem:[#allocation5 + $0xb0] sm:$0xff]
    %v82 = vld [vmem:[#allocation5 + $0xb8] sm:$0xff]
    %v83 = vld [vmem:[#allocation5 + $0xc0] sm:$0xff]
    %v84 = vld [vmem:[#allocation5 + $0xc8] sm:$0xff]
    %v85 = vld [vmem:[#allocation5 + $0xd0] sm:$0xff]
    %v86 = vld [vmem:[#allocation5 + $0xd8] sm:$0xff]
    %v87 = vld [vmem:[#allocation5 + $0xe0] sm:$0xff]
    %v88 = vld [vmem:[#allocation5 + $0xe8] sm:$0xff]
    %v89 = vld [vmem:[#allocation5 + $0xf0] sm:$0xff]
    %v90 = vld [vmem:[#allocation5 + $0xf8] sm:$0xff]
    %v91 = vld [vmem:[#allocation5 + $0x100] sm:$0xff]
    %v92 = vld [vmem:[#allocation5 + $0x108] sm:$0xff]
    %v93 = vld [vmem:[#allocation5 + $0x110] sm:$0xff]
    %v94 = vld [vmem:[#allocation5 + $0x118] sm:$0xff]
    %v95 = vld [vmem:[#allocation5 + $0x120] sm:$0xff]
    %v96 = vld [vmem:[#allocation5 + $0x128] sm:$0xff]
    %v97 = vld [vmem:[#allocation5 + $0x130] sm:$0xff]
    %v98 = vld [vmem:[#allocation5 + $0x138] sm:$0xff]
    %v99 = vld [vmem:[#allocation5 + $0x140] sm:$0xff]
    %v100 = vld [vmem:[#allocation5 + $0x148] sm:$0xff]
    %v101 = vld [vmem:[#allocation5 + $0x150] sm:$0xff]
    %v102 = vld [vmem:[#allocation5 + $0x158] sm:$0xff]
    %v103 = vld [vmem:[#allocation5 + $0x160] sm:$0xff]
    %v104 = vld [vmem:[#allocation5 + $0x168] sm:$0xff]
    %v105 = vld [vmem:[#allocation5 + $0x170] sm:$0xff]
    %v106 = vld [vmem:[#allocation5 + $0x178] sm:$0xff]
    %v107 = vld [vmem:[#allocation5 + $0x180] sm:$0xff]
    %v108 = vld [vmem:[#allocation5 + $0x188] sm:$0xff]
    %v109 = vld [vmem:[#allocation5 + $0x190] sm:$0xff]
    %v110 = vld [vmem:[#allocation5 + $0x198] sm:$0xff]
    %v111 = vld [vmem:[#allocation5 + $0x1a0] sm:$0xff]
    %v112 = vld [vmem:[#allocation5 + $0x1a8] sm:$0xff]
    %v113 = vld [vmem:[#allocation5 + $0x1b0] sm:$0xff]
    %v114 = vld [vmem:[#allocation5 + $0x1b8] sm:$0xff]
    %v115 = vld [vmem:[#allocation5 + $0x1c0] sm:$0xff]
    %v116 = vld [vmem:[#allocation5 + $0x1c8] sm:$0xff]
    %v117 = vld [vmem:[#allocation5 + $0x1d0] sm:$0xff]
    %v118 = vld [vmem:[#allocation5 + $0x1d8] sm:$0xff]
    %v119 = vld [vmem:[#allocation5 + $0x1e0] sm:$0xff]
    %v120 = vld [vmem:[#allocation5 + $0x1e8] sm:$0xff]
    %v121 = vld [vmem:[#allocation5 + $0x1f0] sm:$0xff]
    %v122 = vld [vmem:[#allocation5 + $0x1f8] sm:$0xff]
    %v123 = vld [vmem:[#allocation5 + $0x200] sm:$0xff]
    %v124 = vld [vmem:[#allocation5 + $0x208] sm:$0xff]
    %v125 = vld [vmem:[#allocation5 + $0x210] sm:$0xff]
    %v126 = vld [vmem:[#allocation5 + $0x218] sm:$0xff]
    %v127 = vld [vmem:[#allocation5 + $0x220] sm:$0xff]
    %v128 = vld [vmem:[#allocation5 + $0x228] sm:$0xff]
    %v129 = vld [vmem:[#allocation5 + $0x230] sm:$0xff]
    %v130 = vld [vmem:[#allocation5 + $0x238] sm:$0xff]
    %v131 = vld [vmem:[#allocation5 + $0x240] sm:$0xff]
    %v132 = vld [vmem:[#allocation5 + $0x248] sm:$0xff]
    %v133 = vld [vmem:[#allocation5 + $0x250] sm:$0xff]
    %v134 = vld [vmem:[#allocation5 + $0x258] sm:$0xff]
    %v135 = vld [vmem:[#allocation5 + $0x260] sm:$0xff]
    %v136 = vld [vmem:[#allocation5 + $0x268] sm:$0xff]
    %v137 = vld [vmem:[#allocation5 + $0x270] sm:$0xff]
    %v138 = vld [vmem:[#allocation5 + $0x278] sm:$0xff]
    %v139 = vld [vmem:[#allocation5 + $0x280] sm:$0x11]
    %v140 = vld [vmem:[#allocation5 + $0x288] sm:$0x11]
    %v141 = vld [vmem:[#allocation5 + $0x290] sm:$0x11]
    %v142 = vld [vmem:[#allocation5 + $0x298] sm:$0x11]
    %v143 = vld [vmem:[#allocation7] sm:$0xff]
    %v145 = vlaneseq
    %v146 = vshrl.u32 %v145, 7
    %v147 = vsub.s32 0, %v146
    %v148 = vrot.slane %v143, %v147
    %v149 = vlaneseq
    %v150 = vshrl.u32 %v149, 7
    %v151 = vsub.s32 1, %v150
    %v152 = vrot.slane %v143, %v151
    %v153 = vlaneseq
    %v154 = vshrl.u32 %v153, 7
    %v155 = vsub.s32 2, %v154
    %v156 = vrot.slane %v143, %v155
    %v157 = vlaneseq
    %v158 = vshrl.u32 %v157, 7
    %v159 = vsub.s32 3, %v158
    %v160 = vrot.slane %v143, %v159
    %v161 = vlaneseq
    %v162 = vshrl.u32 %v161, 7
    %v163 = vsub.s32 4, %v162
    %v164 = vrot.slane %v143, %v163
    %v165 = vlaneseq
    %v166 = vshrl.u32 %v165, 7
    %v167 = vsub.s32 5, %v166
    %v168 = vrot.slane %v143, %v167
    %v169 = vlaneseq
    %v170 = vshrl.u32 %v169, 7
    %v171 = vsub.s32 6, %v170
    %v172 = vrot.slane %v143, %v171
    %v173 = vlaneseq
    %v174 = vshrl.u32 %v173, 7
    %v175 = vsub.s32 7, %v174
    %v176 = vrot.slane %v143, %v175
    %v189 = vunpack.c.l.b16 %v55
    %v190 = vunpack.c.h.b16 %v55
    %v191 = vunpack.c.l.b16 %v56
    %v192 = vunpack.c.h.b16 %v56
    %v193 = vunpack.c.l.b16 %v57
    %v194 = vunpack.c.h.b16 %v57
    %v195 = vunpack.c.l.b16 %v58
    %v196 = vunpack.c.h.b16 %v58
    %v197 = vpack.c.b16 %v191, %v189
    %v198 = vpack.c.b16 %v192, %v190
    %v199 = vpack.c.b16 %v195, %v193
    %v200 = vpack.c.b16 %v196, %v194
    %v287 = vunpack.c.l.b16 %v59
    %v288 = vunpack.c.h.b16 %v59
    %v289 = vunpack.c.l.b16 %v60
    %v290 = vunpack.c.h.b16 %v60
    %v291 = vunpack.c.l.b16 %v61
    %v292 = vunpack.c.h.b16 %v61
    %v293 = vunpack.c.l.b16 %v62
    %v294 = vunpack.c.h.b16 %v62
    %v295 = vunpack.c.l.b16 %v63
    %v296 = vunpack.c.h.b16 %v63
    %v297 = vunpack.c.l.b16 %v64
    %v298 = vunpack.c.h.b16 %v64
    %v299 = vunpack.c.l.b16 %v65
    %v300 = vunpack.c.h.b16 %v65
    %v301 = vunpack.c.l.b16 %v66
    %v302 = vunpack.c.h.b16 %v66
    %v303 = vunpack.c.l.b16 %v67
    %v304 = vunpack.c.h.b16 %v67
    %v305 = vunpack.c.l.b16 %v68
    %v306 = vunpack.c.h.b16 %v68
    %v307 = vunpack.c.l.b16 %v69
    %v308 = vunpack.c.h.b16 %v69
    %v309 = vunpack.c.l.b16 %v70
    %v310 = vunpack.c.h.b16 %v70
    %v311 = vunpack.c.l.b16 %v71
    %v312 = vunpack.c.h.b16 %v71
    %v313 = vunpack.c.l.b16 %v72
    %v314 = vunpack.c.h.b16 %v72
    %v315 = vunpack.c.l.b16 %v73
    %v316 = vunpack.c.h.b16 %v73
    %v317 = vunpack.c.l.b16 %v74
    %v318 = vunpack.c.h.b16 %v74
    %v319 = vunpack.c.l.b16 %v75
    %v320 = vunpack.c.h.b16 %v75
    %v321 = vunpack.c.l.b16 %v76
    %v322 = vunpack.c.h.b16 %v76
    %v323 = vunpack.c.l.b16 %v77
    %v324 = vunpack.c.h.b16 %v77
    %v325 = vunpack.c.l.b16 %v78
    %v326 = vunpack.c.h.b16 %v78
    %v327 = vunpack.c.l.b16 %v79
    %v328 = vunpack.c.h.b16 %v79
    %v329 = vunpack.c.l.b16 %v80
    %v330 = vunpack.c.h.b16 %v80
    %v331 = vunpack.c.l.b16 %v81
    %v332 = vunpack.c.h.b16 %v81
    %v333 = vunpack.c.l.b16 %v82
    %v334 = vunpack.c.h.b16 %v82
    %v335 = vunpack.c.l.b16 %v83
    %v336 = vunpack.c.h.b16 %v83
    %v337 = vunpack.c.l.b16 %v84
    %v338 = vunpack.c.h.b16 %v84
    %v339 = vunpack.c.l.b16 %v85
    %v340 = vunpack.c.h.b16 %v85
    %v341 = vunpack.c.l.b16 %v86
    %v342 = vunpack.c.h.b16 %v86
    %v343 = vunpack.c.l.b16 %v87
    %v344 = vunpack.c.h.b16 %v87
    %v345 = vunpack.c.l.b16 %v88
    %v346 = vunpack.c.h.b16 %v88
    %v347 = vunpack.c.l.b16 %v89
    %v348 = vunpack.c.h.b16 %v89
    %v349 = vunpack.c.l.b16 %v90
    %v350 = vunpack.c.h.b16 %v90
    %v351 = vunpack.c.l.b16 %v91
    %v352 = vunpack.c.h.b16 %v91
    %v353 = vunpack.c.l.b16 %v92
    %v354 = vunpack.c.h.b16 %v92
    %v355 = vunpack.c.l.b16 %v93
    %v356 = vunpack.c.h.b16 %v93
    %v357 = vunpack.c.l.b16 %v94
    %v358 = vunpack.c.h.b16 %v94
    %v359 = vunpack.c.l.b16 %v95
    %v360 = vunpack.c.h.b16 %v95
    %v361 = vunpack.c.l.b16 %v96
    %v362 = vunpack.c.h.b16 %v96
    %v363 = vunpack.c.l.b16 %v97
    %v364 = vunpack.c.h.b16 %v97
    %v365 = vunpack.c.l.b16 %v98
    %v366 = vunpack.c.h.b16 %v98
    %v367 = vunpack.c.l.b16 %v99
    %v368 = vunpack.c.h.b16 %v99
    %v369 = vunpack.c.l.b16 %v100
    %v370 = vunpack.c.h.b16 %v100
    %v371 = vunpack.c.l.b16 %v101
    %v372 = vunpack.c.h.b16 %v101
    %v373 = vunpack.c.l.b16 %v102
    %v374 = vunpack.c.h.b16 %v102
    %v375 = vunpack.c.l.b16 %v103
    %v376 = vunpack.c.h.b16 %v103
    %v377 = vunpack.c.l.b16 %v104
    %v378 = vunpack.c.h.b16 %v104
    %v379 = vunpack.c.l.b16 %v105
    %v380 = vunpack.c.h.b16 %v105
    %v381 = vunpack.c.l.b16 %v106
    %v382 = vunpack.c.h.b16 %v106
    %v383 = vunpack.c.l.b16 %v107
    %v384 = vunpack.c.h.b16 %v107
    %v385 = vunpack.c.l.b16 %v108
    %v386 = vunpack.c.h.b16 %v108
    %v387 = vunpack.c.l.b16 %v109
    %v388 = vunpack.c.h.b16 %v109
    %v389 = vunpack.c.l.b16 %v110
    %v390 = vunpack.c.h.b16 %v110
    %v391 = vunpack.c.l.b16 %v111
    %v392 = vunpack.c.h.b16 %v111
    %v393 = vunpack.c.l.b16 %v112
    %v394 = vunpack.c.h.b16 %v112
    %v395 = vunpack.c.l.b16 %v113
    %v396 = vunpack.c.h.b16 %v113
    %v397 = vunpack.c.l.b16 %v114
    %v398 = vunpack.c.h.b16 %v114
    %v399 = vunpack.c.l.b16 %v115
    %v400 = vunpack.c.h.b16 %v115
    %v401 = vunpack.c.l.b16 %v116
    %v402 = vunpack.c.h.b16 %v116
    %v403 = vunpack.c.l.b16 %v117
    %v404 = vunpack.c.h.b16 %v117
    %v405 = vunpack.c.l.b16 %v118
    %v406 = vunpack.c.h.b16 %v118
    %v407 = vunpack.c.l.b16 %v119
    %v408 = vunpack.c.h.b16 %v119
    %v409 = vunpack.c.l.b16 %v120
    %v410 = vunpack.c.h.b16 %v120
    %v411 = vunpack.c.l.b16 %v121
    %v412 = vunpack.c.h.b16 %v121
    %v413 = vunpack.c.l.b16 %v122
    %v414 = vunpack.c.h.b16 %v122
    %v415 = vunpack.c.l.b16 %v123
    %v416 = vunpack.c.h.b16 %v123
    %v417 = vunpack.c.l.b16 %v124
    %v418 = vunpack.c.h.b16 %v124
    %v419 = vunpack.c.l.b16 %v125
    %v420 = vunpack.c.h.b16 %v125
    %v421 = vunpack.c.l.b16 %v126
    %v422 = vunpack.c.h.b16 %v126
    %v423 = vunpack.c.l.b16 %v127
    %v424 = vunpack.c.h.b16 %v127
    %v425 = vunpack.c.l.b16 %v128
    %v426 = vunpack.c.h.b16 %v128
    %v427 = vunpack.c.l.b16 %v129
    %v428 = vunpack.c.h.b16 %v129
    %v429 = vunpack.c.l.b16 %v130
    %v430 = vunpack.c.h.b16 %v130
    %v431 = vunpack.c.l.b16 %v131
    %v432 = vunpack.c.h.b16 %v131
    %v433 = vunpack.c.l.b16 %v132
    %v434 = vunpack.c.h.b16 %v132
    %v435 = vunpack.c.l.b16 %v133
    %v436 = vunpack.c.h.b16 %v133
    %v437 = vunpack.c.l.b16 %v134
    %v438 = vunpack.c.h.b16 %v134
    %v439 = vunpack.c.l.b16 %v135
    %v440 = vunpack.c.h.b16 %v135
    %v441 = vunpack.c.l.b16 %v136
    %v442 = vunpack.c.h.b16 %v136
    %v443 = vunpack.c.l.b16 %v137
    %v444 = vunpack.c.h.b16 %v137
    %v445 = vunpack.c.l.b16 %v138
    %v446 = vunpack.c.h.b16 %v138
    %v447 = vunpack.c.l.b16 %v139
    %v448 = vunpack.c.h.b16 %v139
    %v449 = vunpack.c.l.b16 %v140
    %v450 = vunpack.c.h.b16 %v140
    %v451 = vunpack.c.l.b16 %v141
    %v452 = vunpack.c.h.b16 %v141
    %v453 = vunpack.c.l.b16 %v142
    %v454 = vunpack.c.h.b16 %v142
    %v455 = vpack.c.b16 %v295, %v287
    %v456 = vpack.c.b16 %v296, %v288
    %v457 = vpack.c.b16 %v297, %v289
    %v458 = vpack.c.b16 %v298, %v290
    %v459 = vpack.c.b16 %v299, %v291
    %v460 = vpack.c.b16 %v300, %v292
    %v461 = vpack.c.b16 %v301, %v293
    %v462 = vpack.c.b16 %v302, %v294
    %v463 = vpack.c.b16 %v311, %v303
    %v464 = vpack.c.b16 %v312, %v304
    %v465 = vpack.c.b16 %v313, %v305
    %v466 = vpack.c.b16 %v314, %v306
    %v467 = vpack.c.b16 %v315, %v307
    %v468 = vpack.c.b16 %v316, %v308
    %v469 = vpack.c.b16 %v317, %v309
    %v470 = vpack.c.b16 %v318, %v310
    %v471 = vpack.c.b16 %v327, %v319
    %v472 = vpack.c.b16 %v328, %v320
    %v473 = vpack.c.b16 %v329, %v321
    %v474 = vpack.c.b16 %v330, %v322
    %v475 = vpack.c.b16 %v331, %v323
    %v476 = vpack.c.b16 %v332, %v324
    %v477 = vpack.c.b16 %v333, %v325
    %v478 = vpack.c.b16 %v334, %v326
    %v479 = vpack.c.b16 %v343, %v335
    %v480 = vpack.c.b16 %v344, %v336
    %v481 = vpack.c.b16 %v345, %v337
    %v482 = vpack.c.b16 %v346, %v338
    %v483 = vpack.c.b16 %v347, %v339
    %v484 = vpack.c.b16 %v348, %v340
    %v485 = vpack.c.b16 %v349, %v341
    %v486 = vpack.c.b16 %v350, %v342
    %v487 = vpack.c.b16 %v359, %v351
    %v488 = vpack.c.b16 %v360, %v352
    %v489 = vpack.c.b16 %v361, %v353
    %v490 = vpack.c.b16 %v362, %v354
    %v491 = vpack.c.b16 %v363, %v355
    %v492 = vpack.c.b16 %v364, %v356
    %v493 = vpack.c.b16 %v365, %v357
    %v494 = vpack.c.b16 %v366, %v358
    %v495 = vpack.c.b16 %v375, %v367
    %v496 = vpack.c.b16 %v376, %v368
    %v497 = vpack.c.b16 %v377, %v369
    %v498 = vpack.c.b16 %v378, %v370
    %v499 = vpack.c.b16 %v379, %v371
    %v500 = vpack.c.b16 %v380, %v372
    %v501 = vpack.c.b16 %v381, %v373
    %v502 = vpack.c.b16 %v382, %v374
    %v503 = vpack.c.b16 %v391, %v383
    %v504 = vpack.c.b16 %v392, %v384
    %v505 = vpack.c.b16 %v393, %v385
    %v506 = vpack.c.b16 %v394, %v386
    %v507 = vpack.c.b16 %v395, %v387
    %v508 = vpack.c.b16 %v396, %v388
    %v509 = vpack.c.b16 %v397, %v389
    %v510 = vpack.c.b16 %v398, %v390
    %v511 = vpack.c.b16 %v407, %v399
    %v512 = vpack.c.b16 %v408, %v400
    %v513 = vpack.c.b16 %v409, %v401
    %v514 = vpack.c.b16 %v410, %v402
    %v515 = vpack.c.b16 %v411, %v403
    %v516 = vpack.c.b16 %v412, %v404
    %v517 = vpack.c.b16 %v413, %v405
    %v518 = vpack.c.b16 %v414, %v406
    %v519 = vpack.c.b16 %v423, %v415
    %v520 = vpack.c.b16 %v424, %v416
    %v521 = vpack.c.b16 %v425, %v417
    %v522 = vpack.c.b16 %v426, %v418
    %v523 = vpack.c.b16 %v427, %v419
    %v524 = vpack.c.b16 %v428, %v420
    %v525 = vpack.c.b16 %v429, %v421
    %v526 = vpack.c.b16 %v430, %v422
    %v527 = vpack.c.b16 %v439, %v431
    %v528 = vpack.c.b16 %v440, %v432
    %v529 = vpack.c.b16 %v441, %v433
    %v530 = vpack.c.b16 %v442, %v434
    %v531 = vpack.c.b16 %v443, %v435
    %v532 = vpack.c.b16 %v444, %v436
    %v533 = vpack.c.b16 %v445, %v437
    %v534 = vpack.c.b16 %v446, %v438
    %v535 = vpack.c.b16 %v447, %v447
    %v536 = vpack.c.b16 %v448, %v448
    %v537 = vpack.c.b16 %v449, %v449
    %v538 = vpack.c.b16 %v450, %v450
    %v539 = vpack.c.b16 %v451, %v451
    %v540 = vpack.c.b16 %v452, %v452
    %v541 = vpack.c.b16 %v453, %v453
    %v542 = vpack.c.b16 %v454, %v454
    %vm623 = vcmask 277504
    %v625 = vsel %vm623, %v198, 0
    %v628 = vsel %vm623, %v200, 0
    %vm630 = vcmask 1040384
    %v632 = vsel %vm630, %v535, 0
    %v635 = vsel %vm630, %v536, 0
    %v638 = vsel %vm630, %v537, 0
    %v641 = vsel %vm630, %v538, 0
    %v644 = vsel %vm630, %v539, 0
    %v647 = vsel %vm630, %v540, 0
    %v650 = vsel %vm630, %v541, 0
    %v653 = vsel %vm630, %v542, 0
    %655 = vmatprep.subr.bf16.mxu0 %v456
    %656 = vmatpush1.bf16.msra.mxu0 %v455
    %657 = vmatprep.subr.bf16.mxu0 %v464
    %658 = vmatpush1.bf16.msra.mxu0 %v463
    %659 = vmatprep.subr.bf16.mxu0 %v472
    %660 = vmatpush1.bf16.msra.mxu0 %v471
    %661 = vmatprep.subr.bf16.mxu0 %v480
    %662 = vmatpush1.bf16.msra.mxu0 %v479
    %663 = vmatprep.subr.bf16.mxu0 %v488
    %664 = vmatpush1.bf16.msra.mxu0 %v487
    %665 = vmatprep.subr.bf16.mxu0 %v496
    %666 = vmatpush1.bf16.msra.mxu0 %v495
    %667 = vmatprep.subr.bf16.mxu0 %v504
    %668 = vmatpush1.bf16.msra.mxu0 %v503
    %669 = vmatprep.subr.bf16.mxu0 %v512
    %670 = vmatpush1.bf16.msra.mxu0 %v511
    %671 = vmatprep.subr.bf16.mxu0 %v520
    %672 = vmatpush1.bf16.msra.mxu0 %v519
    %673 = vmatprep.subr.bf16.mxu0 %v528
    %674 = vmatpush1.bf16.msra.mxu0 %v527
    %675 = vmatprep.subr.bf16.mxu0 %v635
    %676 = vmatpush1.bf16.msra.mxu0 %v632
    %677 = vmatprep.subr.bf16.mxu0 0
    %678 = vmatpush1.bf16.msra.mxu0 0
    %679 = vmatprep.subr.bf16.mxu0 0
    %680 = vmatpush1.bf16.msra.mxu0 0
    %681 = vmatprep.subr.bf16.mxu0 0
    %682 = vmatpush1.bf16.msra.mxu0 0
    %683 = vmatprep.subr.bf16.mxu0 0
    %684 = vmatpush1.bf16.msra.mxu0 0
    %685 = vmatprep.subr.bf16.mxu0 0
    %686 = vmatpush1.bf16.msra.mxu0 0
    %687 = vmatprep.mubr.bf16.mxu0 %v625
    %688 = vmatmul.mubr.bf16.gmra.mrb[0].mxu0 %v197
    %v689 = vpop.f32.mrb[0].mxu0
    %v690 = vadd.f32 %v148, %v689
    %v691 = vpop.f32.mrb[0].mxu0
    %v692 = vadd.f32 %v152, %v691
    %v693 = vpop.f32.mrb[0].mxu0
    %v694 = vadd.f32 %v148, %v693
    %v695 = vpop.f32.mrb[0].mxu0
    %v696 = vadd.f32 %v152, %v695
    %697 = vmatprep.mubr.bf16.mxu0 %v628
    %698 = vmatmul.mubr.bf16.gmra.mrb[0].mxu0 %v199
    %v699 = vpop.f32.mrb[0].mxu0
    %v700 = vadd.f32 %v148, %v699
    %v701 = vpop.f32.mrb[0].mxu0
    %v702 = vadd.f32 %v152, %v701
    %v703 = vpop.f32.mrb[0].mxu0
    %v704 = vadd.f32 %v148, %v703
    %v705 = vpop.f32.mrb[0].mxu0
    %v706 = vadd.f32 %v152, %v705
    %707 = vdwg.mxu0
    %708 = vmatprep.subr.bf16.mxu0 %v458
    %709 = vmatpush1.bf16.msra.mxu0 %v457
    %710 = vmatprep.subr.bf16.mxu0 %v466
    %711 = vmatpush1.bf16.msra.mxu0 %v465
    %712 = vmatprep.subr.bf16.mxu0 %v474
    %713 = vmatpush1.bf16.msra.mxu0 %v473
    %714 = vmatprep.subr.bf16.mxu0 %v482
    %715 = vmatpush1.bf16.msra.mxu0 %v481
    %716 = vmatprep.subr.bf16.mxu0 %v490
    %717 = vmatpush1.bf16.msra.mxu0 %v489
    %718 = vmatprep.subr.bf16.mxu0 %v498
    %719 = vmatpush1.bf16.msra.mxu0 %v497
    %720 = vmatprep.subr.bf16.mxu0 %v506
    %721 = vmatpush1.bf16.msra.mxu0 %v505
    %722 = vmatprep.subr.bf16.mxu0 %v514
    %723 = vmatpush1.bf16.msra.mxu0 %v513
    %724 = vmatprep.subr.bf16.mxu0 %v522
    %725 = vmatpush1.bf16.msra.mxu0 %v521
    %726 = vmatprep.subr.bf16.mxu0 %v530
    %727 = vmatpush1.bf16.msra.mxu0 %v529
    %728 = vmatprep.subr.bf16.mxu0 %v641
    %729 = vmatpush1.bf16.msra.mxu0 %v638
    %730 = vmatprep.subr.bf16.mxu0 0
    %731 = vmatpush1.bf16.msra.mxu0 0
    %732 = vmatprep.subr.bf16.mxu0 0
    %733 = vmatpush1.bf16.msra.mxu0 0
    %734 = vmatprep.subr.bf16.mxu0 0
    %735 = vmatpush1.bf16.msra.mxu0 0
    %736 = vmatprep.subr.bf16.mxu0 0
    %737 = vmatpush1.bf16.msra.mxu0 0
    %738 = vmatprep.subr.bf16.mxu0 0
    %739 = vmatpush1.bf16.msra.mxu0 0
    %740 = vmatprep.mubr.bf16.mxu0 %v625
    %741 = vmatmul.mubr.bf16.gmra.mrb[0].mxu0 %v197
    %v742 = vpop.f32.mrb[0].mxu0
    %v743 = vadd.f32 %v156, %v742
    %v744 = vpop.f32.mrb[0].mxu0
    %v745 = vadd.f32 %v160, %v744
    %v746 = vpop.f32.mrb[0].mxu0
    %v747 = vadd.f32 %v156, %v746
    %v748 = vpop.f32.mrb[0].mxu0
    %v749 = vadd.f32 %v160, %v748
    %750 = vmatprep.mubr.bf16.mxu0 %v628
    %751 = vmatmul.mubr.bf16.gmra.mrb[0].mxu0 %v199
    %v752 = vpop.f32.mrb[0].mxu0
    %v753 = vadd.f32 %v156, %v752
    %v754 = vpop.f32.mrb[0].mxu0
    %v755 = vadd.f32 %v160, %v754
    %v756 = vpop.f32.mrb[0].mxu0
    %v757 = vadd.f32 %v156, %v756
    %v758 = vpop.f32.mrb[0].mxu0
    %v759 = vadd.f32 %v160, %v758
    %760 = vdwg.mxu0
    %761 = vmatprep.subr.bf16.mxu0 %v460
    %762 = vmatpush1.bf16.msra.mxu0 %v459
    %763 = vmatprep.subr.bf16.mxu0 %v468
    %764 = vmatpush1.bf16.msra.mxu0 %v467
    %765 = vmatprep.subr.bf16.mxu0 %v476
    %766 = vmatpush1.bf16.msra.mxu0 %v475
    %767 = vmatprep.subr.bf16.mxu0 %v484
    %768 = vmatpush1.bf16.msra.mxu0 %v483
    %769 = vmatprep.subr.bf16.mxu0 %v492
    %770 = vmatpush1.bf16.msra.mxu0 %v491
    %771 = vmatprep.subr.bf16.mxu0 %v500
    %772 = vmatpush1.bf16.msra.mxu0 %v499
    %773 = vmatprep.subr.bf16.mxu0 %v508
    %774 = vmatpush1.bf16.msra.mxu0 %v507
    %775 = vmatprep.subr.bf16.mxu0 %v516
    %776 = vmatpush1.bf16.msra.mxu0 %v515
    %777 = vmatprep.subr.bf16.mxu0 %v524
    %778 = vmatpush1.bf16.msra.mxu0 %v523
    %779 = vmatprep.subr.bf16.mxu0 %v532
    %780 = vmatpush1.bf16.msra.mxu0 %v531
    %781 = vmatprep.subr.bf16.mxu0 %v647
    %782 = vmatpush1.bf16.msra.mxu0 %v644
    %783 = vmatprep.subr.bf16.mxu0 0
    %784 = vmatpush1.bf16.msra.mxu0 0
    %785 = vmatprep.subr.bf16.mxu0 0
    %786 = vmatpush1.bf16.msra.mxu0 0
    %787 = vmatprep.subr.bf16.mxu0 0
    %788 = vmatpush1.bf16.msra.mxu0 0
    %789 = vmatprep.subr.bf16.mxu0 0
    %790 = vmatpush1.bf16.msra.mxu0 0
    %791 = vmatprep.subr.bf16.mxu0 0
    %792 = vmatpush1.bf16.msra.mxu0 0
    %793 = vmatprep.mubr.bf16.mxu0 %v625
    %794 = vmatmul.mubr.bf16.gmra.mrb[0].mxu0 %v197
    %v795 = vpop.f32.mrb[0].mxu0
    %v796 = vadd.f32 %v164, %v795
    %v797 = vpop.f32.mrb[0].mxu0
    %v798 = vadd.f32 %v168, %v797
    %v799 = vpop.f32.mrb[0].mxu0
    %v800 = vadd.f32 %v164, %v799
    %v801 = vpop.f32.mrb[0].mxu0
    %v802 = vadd.f32 %v168, %v801
    %803 = vmatprep.mubr.bf16.mxu0 %v628
    %804 = vmatmul.mubr.bf16.gmra.mrb[0].mxu0 %v199
    %v805 = vpop.f32.mrb[0].mxu0
    %v806 = vadd.f32 %v164, %v805
    %v807 = vpop.f32.mrb[0].mxu0
    %v808 = vadd.f32 %v168, %v807
    %v809 = vpop.f32.mrb[0].mxu0
    %v810 = vadd.f32 %v164, %v809
    %v811 = vpop.f32.mrb[0].mxu0
    %v812 = vadd.f32 %v168, %v811
    %813 = vdwg.mxu0
    %814 = vmatprep.subr.bf16.mxu0 %v462
    %815 = vmatpush1.bf16.msra.mxu0 %v461
    %816 = vmatprep.subr.bf16.mxu0 %v470
    %817 = vmatpush1.bf16.msra.mxu0 %v469
    %818 = vmatprep.subr.bf16.mxu0 %v478
    %819 = vmatpush1.bf16.msra.mxu0 %v477
    %820 = vmatprep.subr.bf16.mxu0 %v486
    %821 = vmatpush1.bf16.msra.mxu0 %v485
    %822 = vmatprep.subr.bf16.mxu0 %v494
    %823 = vmatpush1.bf16.msra.mxu0 %v493
    %824 = vmatprep.subr.bf16.mxu0 %v502
    %825 = vmatpush1.bf16.msra.mxu0 %v501
    %826 = vmatprep.subr.bf16.mxu0 %v510
    %827 = vmatpush1.bf16.msra.mxu0 %v509
    %828 = vmatprep.subr.bf16.mxu0 %v518
    %829 = vmatpush1.bf16.msra.mxu0 %v517
    %830 = vmatprep.subr.bf16.mxu0 %v526
    %831 = vmatpush1.bf16.msra.mxu0 %v525
    %832 = vmatprep.subr.bf16.mxu0 %v534
    %833 = vmatpush1.bf16.msra.mxu0 %v533
    %834 = vmatprep.subr.bf16.mxu0 %v653
    %835 = vmatpush1.bf16.msra.mxu0 %v650
    %836 = vmatprep.subr.bf16.mxu0 0
    %837 = vmatpush1.bf16.msra.mxu0 0
    %838 = vmatprep.subr.bf16.mxu0 0
    %839 = vmatpush1.bf16.msra.mxu0 0
    %840 = vmatprep.subr.bf16.mxu0 0
    %841 = vmatpush1.bf16.msra.mxu0 0
    %842 = vmatprep.subr.bf16.mxu0 0
    %843 = vmatpush1.bf16.msra.mxu0 0
    %844 = vmatprep.subr.bf16.mxu0 0
    %845 = vmatpush1.bf16.msra.mxu0 0
    %846 = vmatprep.mubr.bf16.mxu0 %v625
    %847 = vmatmul.mubr.bf16.gmra.mrb[0].mxu0 %v197
    %v848 = vpop.f32.mrb[0].mxu0
    %v849 = vadd.f32 %v172, %v848
    %v850 = vpop.f32.mrb[0].mxu0
    %v851 = vadd.f32 %v176, %v850
    %v852 = vpop.f32.mrb[0].mxu0
    %v853 = vadd.f32 %v172, %v852
    %v854 = vpop.f32.mrb[0].mxu0
    %v855 = vadd.f32 %v176, %v854
    %856 = vmatprep.mubr.bf16.mxu0 %v628
    %857 = vmatmul.mubr.bf16.gmra.mrb[0].mxu0 %v199
    %v858 = vpop.f32.mrb[0].mxu0
    %v859 = vadd.f32 %v172, %v858
    %v860 = vpop.f32.mrb[0].mxu0
    %v861 = vadd.f32 %v176, %v860
    %v862 = vpop.f32.mrb[0].mxu0
    %v863 = vadd.f32 %v172, %v862
    %v864 = vpop.f32.mrb[0].mxu0
    %v865 = vadd.f32 %v176, %v864
    %866 = vdwg.mxu0
    %867 = vst [vmem:[#allocation8] sm:$0xff] %v690
    %868 = vst [vmem:[#allocation8 + $0x8] sm:$0xff] %v692
    %869 = vst [vmem:[#allocation8 + $0x10] sm:$0xff] %v743
    %870 = vst [vmem:[#allocation8 + $0x18] sm:$0xff] %v745
    %871 = vst [vmem:[#allocation8 + $0x20] sm:$0xff] %v796
    %872 = vst [vmem:[#allocation8 + $0x28] sm:$0xff] %v798
    %873 = vst [vmem:[#allocation8 + $0x30] sm:$0xff] %v849
    %874 = vst [vmem:[#allocation8 + $0x38] sm:$0xff] %v851
    %875 = vst [vmem:[#allocation8 + $0x40] sm:$0xff] %v694
    %876 = vst [vmem:[#allocation8 + $0x48] sm:$0xff] %v696
    %877 = vst [vmem:[#allocation8 + $0x50] sm:$0xff] %v747
    %878 = vst [vmem:[#allocation8 + $0x58] sm:$0xff] %v749
    %879 = vst [vmem:[#allocation8 + $0x60] sm:$0xff] %v800
    %880 = vst [vmem:[#allocation8 + $0x68] sm:$0xff] %v802
    %881 = vst [vmem:[#allocation8 + $0x70] sm:$0xff] %v853
    %882 = vst [vmem:[#allocation8 + $0x78] sm:$0xff] %v855
    %883 = vst [vmem:[#allocation8 + $0x80] sm:$0xff] %v700
    %884 = vst [vmem:[#allocation8 + $0x88] sm:$0xff] %v702
    %885 = vst [vmem:[#allocation8 + $0x90] sm:$0xff] %v753
    %886 = vst [vmem:[#allocation8 + $0x98] sm:$0xff] %v755
    %887 = vst [vmem:[#allocation8 + $0xa0] sm:$0xff] %v806
    %888 = vst [vmem:[#allocation8 + $0xa8] sm:$0xff] %v808
    %889 = vst [vmem:[#allocation8 + $0xb0] sm:$0xff] %v859
    %890 = vst [vmem:[#allocation8 + $0xb8] sm:$0xff] %v861
    %891 = vst [vmem:[#allocation8 + $0xc0] sm:$0xff] %v704
    %892 = vst [vmem:[#allocation8 + $0xc8] sm:$0xff] %v706
    %893 = vst [vmem:[#allocation8 + $0xd0] sm:$0xff] %v757
    %894 = vst [vmem:[#allocation8 + $0xd8] sm:$0xff] %v759
    %895 = vst [vmem:[#allocation8 + $0xe0] sm:$0xff] %v810
    %896 = vst [vmem:[#allocation8 + $0xe8] sm:$0xff] %v812
    %897 = vst [vmem:[#allocation8 + $0xf0] sm:$0xff] %v863
    %898 = vst [vmem:[#allocation8 + $0xf8] sm:$0xff] %v865
    // Predicated region
    $region26: #{tpu_custom_call.1} parent=1 // pred_check
      _
    $region27: #{tpu_custom_call.1} parent=1 // pred_check_branch
      %900 = sbr.rel (0) target = $region29
    $region28: #{tpu_custom_call.1} parent=1 // pred_region
      %s902 = ssub.s32 4096, 4096
      %903 = vsyncadd [#allocation4], %s902
      %s904 = sshll.u32 [#allocation8], 4
      %s905 = int_to_ptr.vmem [resolvable:$true] %s904
      %910 = dma.vmem_to_hbm [thread:$0]  %s905, 4096, %s3, [#allocation4], 1024, 1024, 64
    $region29: #{tpu_custom_call.1} parent=1 // pred_fallthru
      _
    // Predicated region
    $region30: #{tpu_custom_call.1} parent=1 // pred_check
      _
    $region31: #{tpu_custom_call.1} parent=1 // pred_check_branch
      %912 = sbr.rel (0) target = $region33
    $region32: #{tpu_custom_call.1} parent=1 // pred_region
      %913 = dma.done [#allocation4], 4096
    $region33: #{tpu_custom_call.1} parent=1 // pred_fallthru
      _
    %914 = vsyncpa [#allocation3], 1
    %915 = vsyncpa [#allocation6], 1
    %916 = vsyncpa [#allocation4], 1

</llo_original>
